<compile_context>
chip_gen: v6e
topology: v6e:2x2x1
jax: 0.10.0
libtpu: 0.0.40
codegen_flags: <defaults>
</compile_context>

<pallas_src>
import jax
import jax.numpy as jnp
import numpy as np
from jax.experimental import pallas as pl
from jax.experimental.pallas import tpu as pltpu

LANES = 128


def _cubic(A, Bv, Cv, D, x):
    # B + 0.5*x*(C - A + x*(2A - 5B + 4C - D + x*(3(B - C) + D - A)))
    return Bv + 0.5 * x * (
        Cv - A + x * (2.0 * A - 5.0 * Bv + 4.0 * Cv - D
                      + x * (3.0 * (Bv - Cv) + D - A))
    )


def _apply_motion(xx, yy, p):
    """The warp() motion-parameter branches from the PyTorch module."""
    p = tuple(float(v) for v in p)
    if len(p) == 2:
        xx_, yy_ = xx + p[0], yy + p[1]
    elif len(p) == 3:
        xx_ = np.cos(p[2]) * xx - np.sin(p[2]) * yy + p[0]
        yy_ = np.sin(p[2]) * xx + np.cos(p[2]) * yy + p[1]
    elif len(p) == 4:
        xx_ = (1 + p[2]) * xx + p[3] * yy + p[0]
        yy_ = p[3] * xx + (1 + p[2]) * yy + p[1]
    elif len(p) == 6:
        xx_ = (1 + p[2]) * xx + p[3] * yy + p[0]
        yy_ = p[4] * xx + (1 + p[5]) * yy + p[1]
    elif len(p) == 8:
        d = p[6] * xx + p[7] * yy + 1
        xx_ = ((1 + p[0]) * xx + p[1] * yy + p[2]) / d
        yy_ = (p[3] * xx + (1 + p[4]) * yy + p[5]) / d
    elif len(p) == 9:
        d = p[6] * xx + p[7] * yy + 1
        xx_ = (p[0] * xx + p[1] * yy + p[2]) / d
        yy_ = (p[3] * xx + p[4] * yy + p[5]) / d
    else:
        raise ValueError("unsupported motion parameter length")
    return xx_, yy_


def _warped_l1_kernel(g_ref, fy_ref, fx_ref, tgt_ref, out_ref):
    # Kernel refs per grid cell (o, i):
    #   g_ref   : (16, TR, 128)  bicubic taps (tap = dy*4 + dx), storage dtype
    #   fy/fx   : (TR, 128)      fractional sampling coords, storage dtype
    #   tgt     : (TR, 128)      target (Bayer-compacted, invalid pixels zeroed)
    #   out_ref : (TR, 128)      per-lane partial L1 sums, resident across i
    @pl.when(pl.program_id(1) == 0)
    def _init():
        out_ref[...] = jnp.zeros_like(out_ref)

    fy = fy_ref[...].astype(jnp.float32)
    fx = fx_ref[...].astype(jnp.float32)

    # y-direction Catmull-Rom-style weights, computed once and shared across
    # the 4 columns (equivalent polynomial to the Horner _cubic form).
    fy2 = fy * fy
    fy3 = fy2 * fy
    wa = 0.5 * (-fy + 2.0 * fy2 - fy3)
    wb = 1.0 + 0.5 * (-5.0 * fy2 + 3.0 * fy3)
    wc = 0.5 * (fy + 4.0 * fy2 - 3.0 * fy3)
    wd = 0.5 * (-fy2 + fy3)

    cols = []
    for j in range(4):
        a = g_ref[0 * 4 + j].astype(jnp.float32)
        b = g_ref[1 * 4 + j].astype(jnp.float32)
        c = g_ref[2 * 4 + j].astype(jnp.float32)
        d = g_ref[3 * 4 + j].astype(jnp.float32)
        cols.append(wa * a + wb * b + wc * c + wd * d)
    warped = _cubic(cols[0], cols[1], cols[2], cols[3], fx)

    # Invalid / padded pixels have taps == 0 and tgt == 0 -> contribute 0.
    out_ref[...] += jnp.abs(warped - tgt_ref[...].astype(jnp.float32))


def _prepare(inp, target, p, max_tile_rows, taps_dtype):
    """Glue (plain JAX): sampling grid, Bayer compaction, 16-tap gather, layout."""
    inp = inp.astype(jnp.float32)
    target = target.astype(jnp.float32)
    B, C, H, W = inp.shape
    assert C == 3, "WarpedLoss assumes 3-channel input"
    HW = H * W

    # Only batch 0 contributes; cast BEFORE the gather so the materialized
    # tap array lands in HBM in the (possibly bf16) storage dtype.
    im = inp[0].astype(taps_dtype)                       # (3, H, W)

    row_g = jnp.broadcast_to(jnp.arange(H, dtype=jnp.int32)[:, None], (H, W)).reshape(HW)
    col_g = jnp.broadcast_to(jnp.arange(W, dtype=jnp.int32)[None, :], (H, W)).reshape(HW)
    rp, cp = row_g % 2, col_g % 2
    # Bayer channel of each pixel: R at (even row, odd col), G where parities
    # match, B at (odd row, even col) — every pixel belongs to exactly one.
    chan = jnp.where(rp == cp, 1,
                     jnp.where((rp == 0) & (cp == 1), 0, 2)).astype(jnp.int32)

    # ---- warp(): sampling grid (channel-independent), flattened over pixels ----
    xx = col_g.astype(jnp.float32) / 2.0
    yy = row_g.astype(jnp.float32) / 2.0
    xx_, yy_ = _apply_motion(xx, yy, p)
    gx = xx_ * 2.0
    gy = yy_ * 2.0

    # ---- bicubic_interpolation(): indices, validity, fractional coords ----
    x0 = jnp.floor(gx - 1.0).astype(jnp.int32)
    y0 = jnp.floor(gy - 1.0).astype(jnp.int32)
    outside = (-x0 > 0) | ((x0 + 3) > (W - 1)) | (-y0 > 0) | ((y0 + 3) > (H - 1))
    wmask = jnp.where(outside, 0.0, 1.0)

    fy = gy - jnp.floor(gy)
    fx = gx - jnp.floor(gx)

    xs = [jnp.clip(x0 + i, 0, W - 1) for i in range(4)]
    ys = [jnp.clip(y0 + i, 0, H - 1) for i in range(4)]

    # ---- target value at each pixel, for that pixel's Bayer channel ----
    # (matches the reference: a 1-channel target must hold exactly 3 values)
    if target.shape[1] == 1:
        target = target.reshape(1, 3, 1, 1)
    tgt_full = jnp.broadcast_to(target, (target.shape[0], 3, H, W))[0]   # batch 0
    tgt = tgt_full[chan, row_g, col_g] * wmask

    # TODO(synk): 16-tap neighbour gather stays in plain JAX (no arbitrary
    # gather primitive in Pallas-TPU); for translation-only warps this could
    # become shifted in-kernel reads of one halo'd tile.
    wmask_t = wmask.astype(taps_dtype)
    taps = [im[chan, ys[dy], xs[dx]] * wmask_t for dy in range(4) for dx in range(4)]

    # ---- tiling geometry: HW pixels -> (Rtot, 128), Rtot = n_outer*n_inner*TR ----
    R0 = -(-HW // LANES)                                  # ceil(HW / 128)
    TR = min(int(max_tile_rows), ((R0 + 7) // 8) * 8)
    TR = max(8, (TR // 8) * 8)                            # multiple of 8
    n_r = -(-R0 // TR)
    n_outer = 1
    for d in range(min(8, n_r), 0, -1):                   # parallel blocks for v7x 2-TC
        if n_r % d == 0:
            n_outer = d
            break
    n_inner = n_r // n_outer
    Rtot = n_r * TR
    pad = Rtot * LANES - HW

    def lay(v):
        return jnp.pad(v.astype(taps_dtype), (0, pad)).reshape(Rtot, LANES)

    gathered = jnp.stack([lay(t) for t in taps], axis=0)  # (16, Rtot, 128)
    return gathered, lay(fy), lay(fx), lay(tgt), TR, n_outer, n_inner


def warped_loss(inp, target, p, *, max_tile_rows=256, taps_dtype=jnp.bfloat16):
    """L1(sum) of the Bayer-masked difference between bicubic-warped inp and target.

    taps_dtype=jnp.bfloat16 (default) halves HBM traffic of the dominant tap
    stream; compute stays f32. Use taps_dtype=jnp.float32 for exact-reference
    validation.
    """
    gathered, fy, fx, tgt, TR, n_outer, n_inner = _prepare(
        inp, target, p, max_tile_rows, taps_dtype)
    Rtot = fy.shape[0]
    HWp = Rtot * LANES

    itemsize = jnp.dtype(taps_dtype).itemsize
    flops = 70 * HWp
    bytes_accessed = ((gathered.size + fy.size + fx.size + tgt.size) * itemsize
                      + n_outer * TR * LANES * 4)

    partials = pl.pallas_call(
        _warped_l1_kernel,
        out_shape=jax.ShapeDtypeStruct((n_outer, TR, LANES), jnp.float32),
        grid=(n_outer, n_inner),
        in_specs=[
            pl.BlockSpec((16, TR, LANES), lambda o, i: (0, o * n_inner + i, 0)),
            pl.BlockSpec((TR, LANES), lambda o, i: (o * n_inner + i, 0)),
            pl.BlockSpec((TR, LANES), lambda o, i: (o * n_inner + i, 0)),
            pl.BlockSpec((TR, LANES), lambda o, i: (o * n_inner + i, 0)),
        ],
        out_specs=pl.BlockSpec((None, TR, LANES), lambda o, i: (o, 0, 0)),
        compiler_params=pltpu.CompilerParams(
            dimension_semantics=("parallel", "arbitrary"),
            vmem_limit_bytes=32 * 1024 * 1024,
        ),
        cost_estimate=pl.CostEstimate(flops=int(flops), transcendentals=0,
                                      bytes_accessed=int(bytes_accessed)),
    )(gathered, fy, fx, tgt)

    # Tiny (n_outer, TR, 128) final reduction of per-lane partial sums.
    return jnp.sum(partials)


def _reference_loss(inp, target, p):
    """Pure-JAX reference with the same semantics as the PyTorch forward."""
    inp = inp.astype(jnp.float32)
    target = target.astype(jnp.float32)
    B, C, H, W = inp.shape
    xx = jnp.broadcast_to(jnp.arange(W, dtype=jnp.float32)[None, :], (H, W)) / 2.0
    yy = jnp.broadcast_to(jnp.arange(H, dtype=jnp.float32)[:, None], (H, W)) / 2.0
    xx_, yy_ = _apply_motion(xx, yy, p)
    gx, gy = xx_ * 2.0, yy_ * 2.0
    x0 = jnp.floor(gx - 1.0).astype(jnp.int32)
    y0 = jnp.floor(gy - 1.0).astype(jnp.int32)
    outside = (-x0 > 0) | ((x0 + 3) > (W - 1)) | (-y0 > 0) | ((y0 + 3) > (H - 1))
    wmask = jnp.where(outside, 0.0, 1.0)
    xs = [jnp.clip(x0 + i, 0, W - 1) for i in range(4)]
    ys = [jnp.clip(y0 + i, 0, H - 1) for i in range(4)]
    fy = (gy - jnp.floor(gy))[None, None]
    fx = (gx - jnp.floor(gx))[None, None]
    cols = []
    for dx in range(4):
        t = [inp[:, :, ys[dy], xs[dx]] for dy in range(4)]
        cols.append(_cubic(t[0], t[1], t[2], t[3], fy))
    warped = _cubic(cols[0], cols[1], cols[2], cols[3], fx)
    bayer = np.zeros((B, C, H, W), np.float32)
    bayer[0, 0, 0::2, 1::2] = 1
    bayer[0, 1, 0::2, 0::2] = 1
    bayer[0, 1, 1::2, 1::2] = 1
    bayer[0, 2, 1::2, 0::2] = 1
    if target.shape[1] == 1:
        target = target.reshape(1, 3, 1, 1)
    target = jnp.broadcast_to(target, (B, C, H, W))
    mask = jnp.asarray(bayer) * wmask[None, None]
    return jnp.sum(jnp.abs(mask * warped - mask * target))


if __name__ == "__main__":
    key = jax.random.PRNGKey(0)
    k1, k2 = jax.random.split(key)
    B, C, H, W = 2, 3, 16, 16
    x = jax.random.uniform(k1, (B, C, H, W), dtype=jnp.float32)
    tgt = jax.random.uniform(k2, (B, C, H, W), dtype=jnp.float32)
    p = (0.6, -0.4)  # translation motion parameters (len(p) == 2 branch)

    ref = _reference_loss(x, tgt, p)

    # Exact-validation path: f32 storage.
    loss_f32 = warped_loss(x, tgt, p, taps_dtype=jnp.float32)
    jax.block_until_ready(loss_f32)
    np.testing.assert_allclose(np.asarray(loss_f32), np.asarray(ref),
                               rtol=1e-5, atol=1e-4)

    # Default fast path: bf16 storage (compute stays f32) -> loose tolerance.
    loss_bf16 = warped_loss(x, tgt, p)
    jax.block_until_ready(loss_bf16)
    np.testing.assert_allclose(np.asarray(loss_bf16), np.asarray(ref),
                               rtol=5e-2, atol=5e-1)

    print("KERNEL_OK")
</pallas_src>

<mosaic_0001>
module attributes {stable_mosaic.version = 11 : i64} {
  func.func @_warped_l1_kernel(%arg0: i32, %arg1: i32, %arg2: memref<16x8x128xf32, #tpu.memory_space<vmem>>, %arg3: memref<8x128xf32, #tpu.memory_space<vmem>>, %arg4: memref<8x128xf32, #tpu.memory_space<vmem>>, %arg5: memref<8x128xf32, #tpu.memory_space<vmem>>, %arg6: memref<1x8x128xf32, #tpu.memory_space<vmem>>) attributes {dimension_semantics = [#tpu.dimension_semantics<parallel>, #tpu.dimension_semantics<arbitrary>], iteration_bounds = array<i64: 1, 1>, scalar_prefetch = 0 : i64, scratch_operands = 0 : i64, tpu.core_type = #tpu.core_type<tc>, window_params = [{transform_indices = @transform_0, window_bounds = array<i64: 16, 8, 128>}, {transform_indices = @transform_1, window_bounds = array<i64: 8, 128>}, {transform_indices = @transform_2, window_bounds = array<i64: 8, 128>}, {transform_indices = @transform_3, window_bounds = array<i64: 8, 128>}, {transform_indices = @transform_4, window_bounds = array<i64: 1, 8, 128>}]} {
    %c0_i32 = arith.constant 0 : i32
    %0 = arith.cmpi eq, %arg1, %c0_i32 : i32
    %1 = arith.extui %0 : i1 to i32
    %c0_i32_0 = arith.constant 0 : i32
    %2 = arith.cmpi ne, %1, %c0_i32_0 : i32
    scf.if %2 {
      %cst_61 = arith.constant 0.000000e+00 : f32
      %129 = vector.broadcast %cst_61 : f32 to vector<8x128xf32>
      %c0_62 = arith.constant 0 : index
      %c0_63 = arith.constant 0 : index
      %c0_64 = arith.constant 0 : index
      %130 = vector.load %arg6[%c0_62, %c0_63, %c0_64] : memref<1x8x128xf32, #tpu.memory_space<vmem>>, vector<1x8x128xf32>
      %131 = vector.shape_cast %130 : vector<1x8x128xf32> to vector<8x128xf32>
      %132 = vector.shape_cast %129 : vector<8x128xf32> to vector<1x8x128xf32>
      tpu.vector_store %arg6[%c0_62, %c0_63, %c0_64], %132 {strides = array<i32>} : memref<1x8x128xf32, #tpu.memory_space<vmem>>, vector<1x8x128xf32>,
    } else {
    }
    %c0 = arith.constant 0 : index
    %c0_1 = arith.constant 0 : index
    %3 = vector.load %arg3[%c0, %c0_1] : memref<8x128xf32, #tpu.memory_space<vmem>>, vector<8x128xf32>
    %c0_2 = arith.constant 0 : index
    %c0_3 = arith.constant 0 : index
    %4 = vector.load %arg4[%c0_2, %c0_3] : memref<8x128xf32, #tpu.memory_space<vmem>>, vector<8x128xf32>
    %5 = arith.mulf %3, %3 : vector<8x128xf32>
    %6 = arith.mulf %5, %3 : vector<8x128xf32>
    %cst = arith.constant 0.000000e+00 : f32
    %7 = vector.broadcast %cst : f32 to vector<8x128xf32>
    %8 = arith.subf %7, %3 : vector<8x128xf32>
    %cst_4 = arith.constant 2.000000e+00 : f32
    %9 = vector.broadcast %cst_4 : f32 to vector<8x128xf32>
    %10 = arith.mulf %9, %5 : vector<8x128xf32>
    %11 = arith.addf %8, %10 : vector<8x128xf32>
    %12 = arith.subf %11, %6 : vector<8x128xf32>
    %cst_5 = arith.constant 5.000000e-01 : f32
    %13 = vector.broadcast %cst_5 : f32 to vector<8x128xf32>
    %14 = arith.mulf %13, %12 : vector<8x128xf32>
    %cst_6 = arith.constant -5.000000e+00 : f32
    %15 = vector.broadcast %cst_6 : f32 to vector<8x128xf32>
    %16 = arith.mulf %15, %5 : vector<8x128xf32>
    %cst_7 = arith.constant 3.000000e+00 : f32
    %17 = vector.broadcast %cst_7 : f32 to vector<8x128xf32>
    %18 = arith.mulf %17, %6 : vector<8x128xf32>
    %19 = arith.addf %16, %18 : vector<8x128xf32>
    %cst_8 = arith.constant 5.000000e-01 : f32
    %20 = vector.broadcast %cst_8 : f32 to vector<8x128xf32>
    %21 = arith.mulf %20, %19 : vector<8x128xf32>
    %cst_9 = arith.constant 1.000000e+00 : f32
    %22 = vector.broadcast %cst_9 : f32 to vector<8x128xf32>
    %23 = arith.addf %22, %21 : vector<8x128xf32>
    %cst_10 = arith.constant 4.000000e+00 : f32
    %24 = vector.broadcast %cst_10 : f32 to vector<8x128xf32>
    %25 = arith.mulf %24, %5 : vector<8x128xf32>
    %26 = arith.addf %3, %25 : vector<8x128xf32>
    %cst_11 = arith.constant 3.000000e+00 : f32
    %27 = vector.broadcast %cst_11 : f32 to vector<8x128xf32>
    %28 = arith.mulf %27, %6 : vector<8x128xf32>
    %29 = arith.subf %26, %28 : vector<8x128xf32>
    %cst_12 = arith.constant 5.000000e-01 : f32
    %30 = vector.broadcast %cst_12 : f32 to vector<8x128xf32>
    %31 = arith.mulf %30, %29 : vector<8x128xf32>
    %cst_13 = arith.constant 0.000000e+00 : f32
    %32 = vector.broadcast %cst_13 : f32 to vector<8x128xf32>
    %33 = arith.subf %32, %5 : vector<8x128xf32>
    %34 = arith.addf %33, %6 : vector<8x128xf32>
    %cst_14 = arith.constant 5.000000e-01 : f32
    %35 = vector.broadcast %cst_14 : f32 to vector<8x128xf32>
    %36 = arith.mulf %35, %34 : vector<8x128xf32>
    %c0_15 = arith.constant 0 : index
    %c0_16 = arith.constant 0 : index
    %c0_17 = arith.constant 0 : index
    %37 = vector.load %arg2[%c0_15, %c0_16, %c0_17] : memref<16x8x128xf32, #tpu.memory_space<vmem>>, vector<1x8x128xf32>
    %38 = vector.shape_cast %37 : vector<1x8x128xf32> to vector<8x128xf32>
    %c4 = arith.constant 4 : index
    %c0_18 = arith.constant 0 : index
    %c0_19 = arith.constant 0 : index
    %39 = vector.load %arg2[%c4, %c0_18, %c0_19] : memref<16x8x128xf32, #tpu.memory_space<vmem>>, vector<1x8x128xf32>
    %40 = vector.shape_cast %39 : vector<1x8x128xf32> to vector<8x128xf32>
    %c8 = arith.constant 8 : index
    %c0_20 = arith.constant 0 : index
    %c0_21 = arith.constant 0 : index
    %41 = vector.load %arg2[%c8, %c0_20, %c0_21] : memref<16x8x128xf32, #tpu.memory_space<vmem>>, vector<1x8x128xf32>
    %42 = vector.shape_cast %41 : vector<1x8x128xf32> to vector<8x128xf32>
    %c12 = arith.constant 12 : index
    %c0_22 = arith.constant 0 : index
    %c0_23 = arith.constant 0 : index
    %43 = vector.load %arg2[%c12, %c0_22, %c0_23] : memref<16x8x128xf32, #tpu.memory_space<vmem>>, vector<1x8x128xf32>
    %44 = vector.shape_cast %43 : vector<1x8x128xf32> to vector<8x128xf32>
    %45 = arith.mulf %14, %38 : vector<8x128xf32>
    %46 = arith.mulf %23, %40 : vector<8x128xf32>
    %47 = arith.addf %45, %46 : vector<8x128xf32>
    %48 = arith.mulf %31, %42 : vector<8x128xf32>
    %49 = arith.addf %47, %48 : vector<8x128xf32>
    %50 = arith.mulf %36, %44 : vector<8x128xf32>
    %51 = arith.addf %49, %50 : vector<8x128xf32>
    %c1 = arith.constant 1 : index
    %c0_24 = arith.constant 0 : index
    %c0_25 = arith.constant 0 : index
    %52 = vector.load %arg2[%c1, %c0_24, %c0_25] : memref<16x8x128xf32, #tpu.memory_space<vmem>>, vector<1x8x128xf32>
    %53 = vector.shape_cast %52 : vector<1x8x128xf32> to vector<8x128xf32>
    %c5 = arith.constant 5 : index
    %c0_26 = arith.constant 0 : index
    %c0_27 = arith.constant 0 : index
    %54 = vector.load %arg2[%c5, %c0_26, %c0_27] : memref<16x8x128xf32, #tpu.memory_space<vmem>>, vector<1x8x128xf32>
    %55 = vector.shape_cast %54 : vector<1x8x128xf32> to vector<8x128xf32>
    %c9 = arith.constant 9 : index
    %c0_28 = arith.constant 0 : index
    %c0_29 = arith.constant 0 : index
    %56 = vector.load %arg2[%c9, %c0_28, %c0_29] : memref<16x8x128xf32, #tpu.memory_space<vmem>>, vector<1x8x128xf32>
    %57 = vector.shape_cast %56 : vector<1x8x128xf32> to vector<8x128xf32>
    %c13 = arith.constant 13 : index
    %c0_30 = arith.constant 0 : index
    %c0_31 = arith.constant 0 : index
    %58 = vector.load %arg2[%c13, %c0_30, %c0_31] : memref<16x8x128xf32, #tpu.memory_space<vmem>>, vector<1x8x128xf32>
    %59 = vector.shape_cast %58 : vector<1x8x128xf32> to vector<8x128xf32>
    %60 = arith.mulf %14, %53 : vector<8x128xf32>
    %61 = arith.mulf %23, %55 : vector<8x128xf32>
    %62 = arith.addf %60, %61 : vector<8x128xf32>
    %63 = arith.mulf %31, %57 : vector<8x128xf32>
    %64 = arith.addf %62, %63 : vector<8x128xf32>
    %65 = arith.mulf %36, %59 : vector<8x128xf32>
    %66 = arith.addf %64, %65 : vector<8x128xf32>
    %c2 = arith.constant 2 : index
    %c0_32 = arith.constant 0 : index
    %c0_33 = arith.constant 0 : index
    %67 = vector.load %arg2[%c2, %c0_32, %c0_33] : memref<16x8x128xf32, #tpu.memory_space<vmem>>, vector<1x8x128xf32>
    %68 = vector.shape_cast %67 : vector<1x8x128xf32> to vector<8x128xf32>
    %c6 = arith.constant 6 : index
    %c0_34 = arith.constant 0 : index
    %c0_35 = arith.constant 0 : index
    %69 = vector.load %arg2[%c6, %c0_34, %c0_35] : memref<16x8x128xf32, #tpu.memory_space<vmem>>, vector<1x8x128xf32>
    %70 = vector.shape_cast %69 : vector<1x8x128xf32> to vector<8x128xf32>
    %c10 = arith.constant 10 : index
    %c0_36 = arith.constant 0 : index
    %c0_37 = arith.constant 0 : index
    %71 = vector.load %arg2[%c10, %c0_36, %c0_37] : memref<16x8x128xf32, #tpu.memory_space<vmem>>, vector<1x8x128xf32>
    %72 = vector.shape_cast %71 : vector<1x8x128xf32> to vector<8x128xf32>
    %c14 = arith.constant 14 : index
    %c0_38 = arith.constant 0 : index
    %c0_39 = arith.constant 0 : index
    %73 = vector.load %arg2[%c14, %c0_38, %c0_39] : memref<16x8x128xf32, #tpu.memory_space<vmem>>, vector<1x8x128xf32>
    %74 = vector.shape_cast %73 : vector<1x8x128xf32> to vector<8x128xf32>
    %75 = arith.mulf %14, %68 : vector<8x128xf32>
    %76 = arith.mulf %23, %70 : vector<8x128xf32>
    %77 = arith.addf %75, %76 : vector<8x128xf32>
    %78 = arith.mulf %31, %72 : vector<8x128xf32>
    %79 = arith.addf %77, %78 : vector<8x128xf32>
    %80 = arith.mulf %36, %74 : vector<8x128xf32>
    %81 = arith.addf %79, %80 : vector<8x128xf32>
    %c3 = arith.constant 3 : index
    %c0_40 = arith.constant 0 : index
    %c0_41 = arith.constant 0 : index
    %82 = vector.load %arg2[%c3, %c0_40, %c0_41] : memref<16x8x128xf32, #tpu.memory_space<vmem>>, vector<1x8x128xf32>
    %83 = vector.shape_cast %82 : vector<1x8x128xf32> to vector<8x128xf32>
    %c7 = arith.constant 7 : index
    %c0_42 = arith.constant 0 : index
    %c0_43 = arith.constant 0 : index
    %84 = vector.load %arg2[%c7, %c0_42, %c0_43] : memref<16x8x128xf32, #tpu.memory_space<vmem>>, vector<1x8x128xf32>
    %85 = vector.shape_cast %84 : vector<1x8x128xf32> to vector<8x128xf32>
    %c11 = arith.constant 11 : index
    %c0_44 = arith.constant 0 : index
    %c0_45 = arith.constant 0 : index
    %86 = vector.load %arg2[%c11, %c0_44, %c0_45] : memref<16x8x128xf32, #tpu.memory_space<vmem>>, vector<1x8x128xf32>
    %87 = vector.shape_cast %86 : vector<1x8x128xf32> to vector<8x128xf32>
    %c15 = arith.constant 15 : index
    %c0_46 = arith.constant 0 : index
    %c0_47 = arith.constant 0 : index
    %88 = vector.load %arg2[%c15, %c0_46, %c0_47] : memref<16x8x128xf32, #tpu.memory_space<vmem>>, vector<1x8x128xf32>
    %89 = vector.shape_cast %88 : vector<1x8x128xf32> to vector<8x128xf32>
    %90 = arith.mulf %14, %83 : vector<8x128xf32>
    %91 = arith.mulf %23, %85 : vector<8x128xf32>
    %92 = arith.addf %90, %91 : vector<8x128xf32>
    %93 = arith.mulf %31, %87 : vector<8x128xf32>
    %94 = arith.addf %92, %93 : vector<8x128xf32>
    %95 = arith.mulf %36, %89 : vector<8x128xf32>
    %96 = arith.addf %94, %95 : vector<8x128xf32>
    %cst_48 = arith.constant 5.000000e-01 : f32
    %97 = vector.broadcast %cst_48 : f32 to vector<8x128xf32>
    %98 = arith.mulf %97, %4 : vector<8x128xf32>
    %99 = arith.subf %81, %51 : vector<8x128xf32>
    %cst_49 = arith.constant 2.000000e+00 : f32
    %100 = vector.broadcast %cst_49 : f32 to vector<8x128xf32>
    %101 = arith.mulf %100, %51 : vector<8x128xf32>
    %cst_50 = arith.constant 5.000000e+00 : f32
    %102 = vector.broadcast %cst_50 : f32 to vector<8x128xf32>
    %103 = arith.mulf %102, %66 : vector<8x128xf32>
    %104 = arith.subf %101, %103 : vector<8x128xf32>
    %cst_51 = arith.constant 4.000000e+00 : f32
    %105 = vector.broadcast %cst_51 : f32 to vector<8x128xf32>
    %106 = arith.mulf %105, %81 : vector<8x128xf32>
    %107 = arith.addf %104, %106 : vector<8x128xf32>
    %108 = arith.subf %107, %96 : vector<8x128xf32>
    %109 = arith.subf %66, %81 : vector<8x128xf32>
    %cst_52 = arith.constant 3.000000e+00 : f32
    %110 = vector.broadcast %cst_52 : f32 to vector<8x128xf32>
    %111 = arith.mulf %110, %109 : vector<8x128xf32>
    %112 = arith.addf %111, %96 : vector<8x128xf32>
    %113 = arith.subf %112, %51 : vector<8x128xf32>
    %114 = arith.mulf %4, %113 : vector<8x128xf32>
    %115 = arith.addf %108, %114 : vector<8x128xf32>
    %116 = arith.mulf %4, %115 : vector<8x128xf32>
    %117 = arith.addf %99, %116 : vector<8x128xf32>
    %118 = arith.mulf %98, %117 : vector<8x128xf32>
    %119 = arith.addf %66, %118 : vector<8x128xf32>
    %c0_53 = arith.constant 0 : index
    %c0_54 = arith.constant 0 : index
    %c0_55 = arith.constant 0 : index
    %120 = vector.load %arg6[%c0_53, %c0_54, %c0_55] : memref<1x8x128xf32, #tpu.memory_space<vmem>>, vector<1x8x128xf32>
    %121 = vector.shape_cast %120 : vector<1x8x128xf32> to vector<8x128xf32>
    %c0_56 = arith.constant 0 : index
    %c0_57 = arith.constant 0 : index
    %122 = vector.load %arg5[%c0_56, %c0_57] : memref<8x128xf32, #tpu.memory_space<vmem>>, vector<8x128xf32>
    %123 = arith.subf %119, %122 : vector<8x128xf32>
    %124 = math.absf %123 : vector<8x128xf32>
    %125 = arith.addf %121, %124 : vector<8x128xf32>
    %c0_58 = arith.constant 0 : index
    %c0_59 = arith.constant 0 : index
    %c0_60 = arith.constant 0 : index
    %126 = vector.load %arg6[%c0_58, %c0_59, %c0_60] : memref<1x8x128xf32, #tpu.memory_space<vmem>>, vector<1x8x128xf32>
    %127 = vector.shape_cast %126 : vector<1x8x128xf32> to vector<8x128xf32>
    %128 = vector.shape_cast %125 : vector<8x128xf32> to vector<1x8x128xf32>
    tpu.vector_store %arg6[%c0_58, %c0_59, %c0_60], %128 {strides = array<i32>} : memref<1x8x128xf32, #tpu.memory_space<vmem>>, vector<1x8x128xf32>,
    return
  }
  func.func @transform_0(%arg0: i32, %arg1: i32) -> (i32, i32, i32) {
    %c1_i32 = arith.constant 1 : i32
    %0 = arith.muli %arg0, %c1_i32 : i32
    %1 = arith.addi %0, %arg1 : i32
    %c0_i32 = arith.constant 0 : i32
    %c0_i32_0 = arith.constant 0 : i32
    %c0_i32_1 = arith.constant 0 : i32
    return %c0_i32, %1, %c0_i32_0 : i32, i32, i32
  }
  func.func @transform_1(%arg0: i32, %arg1: i32) -> (i32, i32) {
    %c1_i32 = arith.constant 1 : i32
    %0 = arith.muli %arg0, %c1_i32 : i32
    %1 = arith.addi %0, %arg1 : i32
    %c0_i32 = arith.constant 0 : i32
    %c0_i32_0 = arith.constant 0 : i32
    return %1, %c0_i32 : i32, i32
  }
  func.func @transform_2(%arg0: i32, %arg1: i32) -> (i32, i32) {
    %c1_i32 = arith.constant 1 : i32
    %0 = arith.muli %arg0, %c1_i32 : i32
    %1 = arith.addi %0, %arg1 : i32
    %c0_i32 = arith.constant 0 : i32
    %c0_i32_0 = arith.constant 0 : i32
    return %1, %c0_i32 : i32, i32
  }
  func.func @transform_3(%arg0: i32, %arg1: i32) -> (i32, i32) {
    %c1_i32 = arith.constant 1 : i32
    %0 = arith.muli %arg0, %c1_i32 : i32
    %1 = arith.addi %0, %arg1 : i32
    %c0_i32 = arith.constant 0 : i32
    %c0_i32_0 = arith.constant 0 : i32
    return %1, %c0_i32 : i32, i32
  }
  func.func @transform_4(%arg0: i32, %arg1: i32) -> (i32, i32, i32) {
    %c0_i32 = arith.constant 0 : i32
    %c0_i32_0 = arith.constant 0 : i32
    %c0_i32_1 = arith.constant 0 : i32
    return %arg0, %c0_i32, %c0_i32_0 : i32, i32, i32
  }
}

</mosaic_0001>

<llo_original>
// kernel: tpu_custom_call.1
$region0: #{tpu_custom_call.1}
  #allocation0 [shape = 'u32[]', space=smem, size = 0x4, offset = 0x4, fixed_abs, tag = 'smem constant byte address 0x4 - core index']
  #allocation1 [shape = 'u32[144,128]{1,0:T(1,128)}', space=vmem, size = 0x12000, scoped, tag = 'internal scratch']
  %s0 = inlined_call_operand.hbm [shape: f32[16,8,128], index: 0, kind: input, shape index: {}]
  %s1 = inlined_call_operand.hbm [shape: f32[8,128], index: 1, kind: input, shape index: {}]
  %s2 = inlined_call_operand.hbm [shape: f32[8,128], index: 2, kind: input, shape index: {}]
  %s3 = inlined_call_operand.hbm [shape: f32[8,128], index: 3, kind: input, shape index: {}]
  %s4 = inlined_call_operand.hbm [shape: f32[1,8,128], index: 4, kind: output, shape index: {}]
  %s5 = sld [smem:[#allocation0]]
  $region46: #{tpu_custom_call.1} parent=0
    _
  %s7 = ssub.s32 1, %s5
  %s8 = scalar_select 0, %s7, %s5
  $region1: #{tpu_custom_call.1} parent=0
    #allocation2 [shape = 'u8[65536]{0}', space=vmem, size = 0x10000, scoped, tag = 'input window, operand 0, single buffered']
    #allocation3 [shape = 's32[1]{0}', space=sflag, size = 0x4, scoped, tag = 'scoped memory for tpu_custom_call.1']
    #allocation4 [shape = 's32[1]{0}', space=sflag, size = 0x4, scoped, tag = 'scoped memory for tpu_custom_call.1']
    #allocation5 [shape = 'u8[4096]{0}', space=vmem, size = 0x1000, scoped, tag = 'input window, operand 1, single buffered']
    #allocation6 [shape = 's32[1]{0}', space=sflag, size = 0x4, scoped, tag = 'scoped memory for tpu_custom_call.1']
    #allocation7 [shape = 'u8[4096]{0}', space=vmem, size = 0x1000, scoped, tag = 'input window, operand 2, single buffered']
    #allocation8 [shape = 'u8[4096]{0}', space=vmem, size = 0x1000, scoped, tag = 'input window, operand 3, single buffered']
    #allocation9 [shape = 's32[1]{0}', space=sflag, size = 0x4, scoped, tag = 'scoped memory for tpu_custom_call.1']
    #allocation10 [shape = 'u8[4096]{0}', space=vmem, size = 0x1000, scoped, tag = 'output window, operand 0, single buffered']
    %9 = vsyncpa [#allocation3], 0
    %10 = vsyncpa [#allocation6], 0
    %11 = vsyncpa [#allocation9], 0
    %12 = vsyncpa [#allocation4], 0
    // Predicated region
    $region2: #{tpu_custom_call.1} parent=1 // pred_check
      _
    $region3: #{tpu_custom_call.1} parent=1 // pred_check_branch
      %14 = sbr.rel (0) target = $region5
    $region4: #{tpu_custom_call.1} parent=1 // pred_region
      %s15 = sadd.s32 0, 0
      %s17 = ssub.s32 2048, 2048
      %18 = vsyncadd [#allocation3], %s17
      %s19 = smul.addr %s15, 128
      %s20 = scalar_lea.hbm %s0, %s19
      %s21 = sshll.u32 [#allocation2], 4
      %s22 = int_to_ptr.vmem [resolvable:$true] %s21
      %27 = dma.hbm_to_vmem [thread:$0]  %s20, 2048, %s22, [#allocation3], 128, 128, 8
    $region5: #{tpu_custom_call.1} parent=1 // pred_fallthru
      _
    // Predicated region
    $region6: #{tpu_custom_call.1} parent=1 // pred_check
      _
    $region7: #{tpu_custom_call.1} parent=1 // pred_check_branch
      %29 = sbr.rel (0) target = $region9
    $region8: #{tpu_custom_call.1} parent=1 // pred_region
      %s30 = sadd.s32 0, 0
      %s32 = ssub.s32 128, 128
      %33 = vsyncadd [#allocation6], %s32
      %s34 = smul.addr %s30, 128
      %s35 = scalar_lea.hbm %s1, %s34
      %s37 = sshll.u32 [#allocation5], 4
      %s38 = int_to_ptr.vmem [resolvable:$true] %s37
      %40 = dma.hbm_to_vmem [thread:$0]  %s35, 128, %s38, [#allocation6]
    $region9: #{tpu_custom_call.1} parent=1 // pred_fallthru
      _
    // Predicated region
    $region10: #{tpu_custom_call.1} parent=1 // pred_check
      _
    $region11: #{tpu_custom_call.1} parent=1 // pred_check_branch
      %42 = sbr.rel (0) target = $region13
    $region12: #{tpu_custom_call.1} parent=1 // pred_region
      %s43 = sadd.s32 0, 0
      %s45 = ssub.s32 128, 128
      %46 = vsyncadd [#allocation6], %s45
      %s47 = smul.addr %s43, 128
      %s48 = scalar_lea.hbm %s2, %s47
      %s50 = sshll.u32 [#allocation7], 4
      %s51 = int_to_ptr.vmem [resolvable:$true] %s50
      %53 = dma.hbm_to_vmem [thread:$0]  %s48, 128, %s51, [#allocation6]
    $region13: #{tpu_custom_call.1} parent=1 // pred_fallthru
      _
    // Predicated region
    $region14: #{tpu_custom_call.1} parent=1 // pred_check
      _
    $region15: #{tpu_custom_call.1} parent=1 // pred_check_branch
      %55 = sbr.rel (0) target = $region17
    $region16: #{tpu_custom_call.1} parent=1 // pred_region
      %s56 = sadd.s32 0, 0
      %s58 = ssub.s32 128, 128
      %59 = vsyncadd [#allocation9], %s58
      %s60 = smul.addr %s56, 128
      %s61 = scalar_lea.hbm %s3, %s60
      %s63 = sshll.u32 [#allocation8], 4
      %s64 = int_to_ptr.vmem [resolvable:$true] %s63
      %66 = dma.hbm_to_vmem [thread:$0]  %s61, 128, %s64, [#allocation9]
    $region17: #{tpu_custom_call.1} parent=1 // pred_fallthru
      _
    // Predicated region
    $region18: #{tpu_custom_call.1} parent=1 // pred_check
      _
    $region19: #{tpu_custom_call.1} parent=1 // pred_check_branch
      %68 = sbr.rel (0) target = $region21
    $region20: #{tpu_custom_call.1} parent=1 // pred_region
      %69 = dma.done [#allocation3], 2048
    $region21: #{tpu_custom_call.1} parent=1 // pred_fallthru
      _
    // Predicated region
    $region22: #{tpu_custom_call.1} parent=1 // pred_check
      _
    $region23: #{tpu_custom_call.1} parent=1 // pred_check_branch
      %71 = sbr.rel (0) target = $region25
    $region24: #{tpu_custom_call.1} parent=1 // pred_region
      %72 = dma.done [#allocation6], 128
    $region25: #{tpu_custom_call.1} parent=1 // pred_fallthru
      _
    // Predicated region
    $region26: #{tpu_custom_call.1} parent=1 // pred_check
      _
    $region27: #{tpu_custom_call.1} parent=1 // pred_check_branch
      %74 = sbr.rel (0) target = $region29
    $region28: #{tpu_custom_call.1} parent=1 // pred_region
      %75 = dma.done [#allocation6], 128
    $region29: #{tpu_custom_call.1} parent=1 // pred_fallthru
      _
    // Predicated region
    $region30: #{tpu_custom_call.1} parent=1 // pred_check
      _
    $region31: #{tpu_custom_call.1} parent=1 // pred_check_branch
      %77 = sbr.rel (0) target = $region33
    $region32: #{tpu_custom_call.1} parent=1 // pred_region
      %78 = dma.done [#allocation9], 128
    $region33: #{tpu_custom_call.1} parent=1 // pred_fallthru
      _
    %s79 = sadd.s32 0, 0
    %s80 = sadd.s32 0, 0
    %s81 = sadd.s32 0, 0
    %s82 = sadd.s32 0, 0
    %p83 = scmp.eq.s32.totalorder 0, 0
    // Predicated region
    $region34: #{tpu_custom_call.1} parent=1 // pred_check
      %p84 = pneg %p83
    $region35: #{tpu_custom_call.1} parent=1 // pred_check_branch
      %86 = sbr.rel (%p84) target = $region37
    $region36: #{tpu_custom_call.1} parent=1 // pred_region
      %87 = vst [vmem:[#allocation10] sm:$0xff] 0.0
    $region37: #{tpu_custom_call.1} parent=1 // pred_fallthru
      _
    %v88 = vld [vmem:[#allocation5] sm:$0xff]
    %v89 = vld [vmem:[#allocation7] sm:$0xff]
    %v90 = vmul.f32 %v88, %v88
    %v91 = vmul.f32 %v90, %v88
    %v92 = vsub.f32 0.0, %v88
    %v93 = vmul.f32 %v90, 2.0
    %v94 = vadd.f32 %v92, %v93
    %v95 = vsub.f32 %v94, %v91
    %v96 = vmul.f32 %v95, 0.5
    %v97 = vmul.f32 %v90, -5.0
    %v98 = vmul.f32 %v91, 3.0
    %v99 = vadd.f32 %v97, %v98
    %v100 = vmul.f32 %v99, 0.5
    %v101 = vadd.f32 %v100, 1.0
    %v102 = vmul.f32 %v90, 4.0
    %v103 = vadd.f32 %v88, %v102
    %v104 = vsub.f32 %v103, %v98
    %v105 = vmul.f32 %v104, 0.5
    %v106 = vsub.f32 0.0, %v90
    %v107 = vadd.f32 %v106, %v91
    %v108 = vmul.f32 %v107, 0.5
    %v109 = vld [vmem:[#allocation2] sm:$0xff]
    %s110 = scalar_lea.vmem [#allocation2], 32
    %v111 = vld [vmem:[%s110] sm:$0xff]
    %s112 = scalar_lea.vmem [#allocation2], 64
    %v113 = vld [vmem:[%s112] sm:$0xff]
    %s114 = scalar_lea.vmem [#allocation2], 96
    %v115 = vld [vmem:[%s114] sm:$0xff]
    %v116 = vmul.f32 %v96, %v109
    %v117 = vmul.f32 %v101, %v111
    %v118 = vadd.f32 %v116, %v117
    %v119 = vmul.f32 %v105, %v113
    %v120 = vadd.f32 %v118, %v119
    %v121 = vmul.f32 %v108, %v115
    %v122 = vadd.f32 %v120, %v121
    %s123 = scalar_lea.vmem [#allocation2], 8
    %v124 = vld [vmem:[%s123] sm:$0xff]
    %s125 = scalar_lea.vmem [#allocation2], 40
    %v126 = vld [vmem:[%s125] sm:$0xff]
    %s127 = scalar_lea.vmem [#allocation2], 72
    %v128 = vld [vmem:[%s127] sm:$0xff]
    %s129 = scalar_lea.vmem [#allocation2], 104
    %v130 = vld [vmem:[%s129] sm:$0xff]
    %v131 = vmul.f32 %v96, %v124
    %v132 = vmul.f32 %v101, %v126
    %v133 = vadd.f32 %v131, %v132
    %v134 = vmul.f32 %v105, %v128
    %v135 = vadd.f32 %v133, %v134
    %v136 = vmul.f32 %v108, %v130
    %v137 = vadd.f32 %v135, %v136
    %s138 = scalar_lea.vmem [#allocation2], 16
    %v139 = vld [vmem:[%s138] sm:$0xff]
    %s140 = scalar_lea.vmem [#allocation2], 48
    %v141 = vld [vmem:[%s140] sm:$0xff]
    %s142 = scalar_lea.vmem [#allocation2], 80
    %v143 = vld [vmem:[%s142] sm:$0xff]
    %s144 = scalar_lea.vmem [#allocation2], 112
    %v145 = vld [vmem:[%s144] sm:$0xff]
    %v146 = vmul.f32 %v96, %v139
    %v147 = vmul.f32 %v101, %v141
    %v148 = vadd.f32 %v146, %v147
    %v149 = vmul.f32 %v105, %v143
    %v150 = vadd.f32 %v148, %v149
    %v151 = vmul.f32 %v108, %v145
    %v152 = vadd.f32 %v150, %v151
    %s153 = scalar_lea.vmem [#allocation2], 24
    %v154 = vld [vmem:[%s153] sm:$0xff]
    %s155 = scalar_lea.vmem [#allocation2], 56
    %v156 = vld [vmem:[%s155] sm:$0xff]
    %s157 = scalar_lea.vmem [#allocation2], 88
    %v158 = vld [vmem:[%s157] sm:$0xff]
    %s159 = scalar_lea.vmem [#allocation2], 120
    %v160 = vld [vmem:[%s159] sm:$0xff]
    %v161 = vmul.f32 %v96, %v154
    %v162 = vmul.f32 %v101, %v156
    %v163 = vadd.f32 %v161, %v162
    %v164 = vmul.f32 %v105, %v158
    %v165 = vadd.f32 %v163, %v164
    %v166 = vmul.f32 %v108, %v160
    %v167 = vadd.f32 %v165, %v166
    %v168 = vmul.f32 %v89, 0.5
    %v169 = vsub.f32 %v152, %v122
    %v170 = vmul.f32 %v122, 2.0
    %v171 = vmul.f32 %v137, 5.0
    %v172 = vsub.f32 %v170, %v171
    %v173 = vmul.f32 %v152, 4.0
    %v174 = vadd.f32 %v172, %v173
    %v175 = vsub.f32 %v174, %v167
    %v176 = vsub.f32 %v137, %v152
    %v177 = vmul.f32 %v176, 3.0
    %v178 = vadd.f32 %v177, %v167
    %v179 = vsub.f32 %v178, %v122
    %v180 = vmul.f32 %v89, %v179
    %v181 = vadd.f32 %v175, %v180
    %v182 = vmul.f32 %v89, %v181
    %v183 = vadd.f32 %v169, %v182
    %v184 = vmul.f32 %v168, %v183
    %v185 = vadd.f32 %v137, %v184
    %v186 = vld [vmem:[#allocation10] sm:$0xff]
    %v187 = vld [vmem:[#allocation8] sm:$0xff]
    %v188 = vsub.f32 %v185, %v187
    %v189 = vand.u32 2147483647, %v188
    %v190 = vadd.f32 %v186, %v189
    %191 = vst [vmem:[#allocation10] sm:$0xff] %v190
    // Predicated region
    $region38: #{tpu_custom_call.1} parent=1 // pred_check
      _
    $region39: #{tpu_custom_call.1} parent=1 // pred_check_branch
      %193 = sbr.rel (0) target = $region41
    $region40: #{tpu_custom_call.1} parent=1 // pred_region
      %s195 = ssub.s32 128, 128
      %196 = vsyncadd [#allocation4], %s195
      %s198 = sshll.u32 [#allocation10], 4
      %s199 = int_to_ptr.vmem [resolvable:$true] %s198
      %201 = dma.vmem_to_hbm [thread:$0]  %s199, 128, %s4, [#allocation4]
    $region41: #{tpu_custom_call.1} parent=1 // pred_fallthru
      _
    // Predicated region
    $region42: #{tpu_custom_call.1} parent=1 // pred_check
      _
    $region43: #{tpu_custom_call.1} parent=1 // pred_check_branch
      %203 = sbr.rel (0) target = $region45
    $region44: #{tpu_custom_call.1} parent=1 // pred_region
      %204 = dma.done [#allocation4], 128
    $region45: #{tpu_custom_call.1} parent=1 // pred_fallthru
      _
    %205 = vsyncpa [#allocation3], 1
    %206 = vsyncpa [#allocation6], 1
    %207 = vsyncpa [#allocation9], 1
    %208 = vsyncpa [#allocation4], 1

</llo_original>
